<compile_context>
chip_gen: v5e
topology: v5e:2x2
jax: 0.10.0
libtpu: 0.0.40
codegen_flags: <defaults>
</compile_context>

<pallas_src>
import functools

import numpy as np
import jax
import jax.numpy as jnp
from jax import lax
from jax.experimental import pallas as pl
from jax.experimental.pallas import tpu as pltpu


# ----------------------------- Pallas kernel --------------------------------
def _hr_kernel(x_ref, m_ref, w1_ref, b1_ref, w2_ref, b2_ref, w3_ref, b3_ref,
               o_ref, *, rr, Wp, N):
    # ---- AvgPool2d(kernel=r, stride=r): mean of the r*r pooling taps (VPU) ----
    x0 = x_ref[0, 0].astype(jnp.float32)
    for t in range(1, rr):
        x0 = x0 + x_ref[0, t].astype(jnp.float32)
    x0 = x0 * (1.0 / rr)                                         # (Cin, N)

    # ---- conv1 (1x1) + bn1 (folded into weight/bias) + relu ----
    y1 = jnp.dot(w1_ref[...], x0.astype(jnp.bfloat16),
                 preferred_element_type=jnp.float32)
    y1 = jnp.maximum(y1 + b1_ref[...], 0.0)                      # (Cin, N) f32

    # ---- conv2 (3x3, grouped, padding=1) as ONE im2col matmul ----
    # Zero-pad the flattened spatial (lane) axis, take 9 static lane-offset
    # slices (the spatial shifts), mask row wrap-around with tiny precomputed
    # border masks, concatenate along channels, contract once with the
    # block-diagonal dense (BN-folded) weight.
    Cin = y1.shape[0]
    P = Wp + 1
    zpad = jnp.zeros((Cin, P), jnp.float32)
    y1p = jnp.concatenate([zpad, y1, zpad], axis=1)              # (Cin, N + 2P)
    pieces = []
    for kh in range(3):
        for kw in range(3):
            dh, dw = kh - 1, kw - 1
            d = dh * Wp + dw
            piece = y1p[:, P + d:P + d + N]                      # = y1[:, p + d]
            if not (dh == 0 and dw == 0):
                piece = piece * m_ref[kh * 3 + kw]               # (1, N) mask
            pieces.append(piece)
    x2 = jnp.concatenate(pieces, axis=0).astype(jnp.bfloat16)    # (9*Cin, N)
    y2 = jnp.dot(w2_ref[...], x2, preferred_element_type=jnp.float32)
    y2 = y2 + b2_ref[...]                                        # bn2, no relu

    # ---- conv3 (1x1) + bn3 (folded) + relu ----
    y3 = jnp.dot(w3_ref[...], y2.astype(jnp.bfloat16),
                 preferred_element_type=jnp.float32)
    y3 = jnp.maximum(y3 + b3_ref[...], 0.0)                      # (Cout, N)

    o_ref[0] = y3.astype(o_ref.dtype)


# ------------------------------- wrapper -------------------------------------
def hr_forward_pallas(x_nchw, kp, downsample_rate):
    B, Cin, H, W = x_nchw.shape
    r = downsample_rate
    Hp, Wp = H // r, W // r
    N, rr = Hp * Wp, r * r
    Cout = kp["w3"].shape[0]

    # glue: rearrange NCHW into its r*r pooling taps, spatial flattened last:
    #   x_taps[b, dh*r+dw, c, h*Wp+w] = x[b, c, h*r+dh, w*r+dw]
    x_taps = x_nchw.reshape(B, Cin, Hp, r, Wp, r)
    x_taps = jnp.transpose(x_taps, (0, 3, 5, 1, 2, 4)).reshape(B, rr, Cin, N)

    def const_spec(a):
        nd = a.ndim
        return pl.BlockSpec(a.shape, lambda b, _n=nd: (0,) * _n)

    args = (x_taps, kp["masks"], kp["w1"], kp["b1"],
            kp["w2"], kp["b2"], kp["w3"], kp["b3"])
    in_specs = [pl.BlockSpec((1, rr, Cin, N), lambda b: (b, 0, 0, 0))]
    in_specs += [const_spec(a) for a in args[1:]]

    out = pl.pallas_call(
        functools.partial(_hr_kernel, rr=rr, Wp=Wp, N=N),
        out_shape=jax.ShapeDtypeStruct((B, Cout, N), jnp.float32),
        grid=(B,),
        in_specs=in_specs,
        out_specs=pl.BlockSpec((1, Cout, N), lambda b: (b, 0, 0)),
        compiler_params=pltpu.CompilerParams(dimension_semantics=("parallel",)),
    )(*args)

    # glue: (B, Cout, N) is already NCHW once the spatial axis is unflattened.
    return out.reshape(B, Cout, Hp, Wp)


# ----------------------- deterministic parameter setup -----------------------
def make_params(key, in_channels, out_channels, downsample_rate, min_grp, H, W):
    groups = in_channels // min_grp
    cpg = in_channels // groups          # in & out channels per group
    eps = 1e-5
    ks = jax.random.split(key, 18)

    def nrm(k, shape, scale=0.1):
        return scale * jax.random.normal(k, shape, jnp.float32)

    def unif(k, shape, lo=0.5, hi=1.5):
        return jax.random.uniform(k, shape, jnp.float32, lo, hi)

    conv1_w = nrm(ks[0], (in_channels, in_channels, 1, 1))
    conv1_b = nrm(ks[1], (in_channels,))
    g1, be1 = unif(ks[2], (in_channels,)), nrm(ks[3], (in_channels,))
    m1, v1 = nrm(ks[4], (in_channels,)), unif(ks[5], (in_channels,))

    conv2_w = nrm(ks[6], (in_channels, cpg, 3, 3))
    conv2_b = nrm(ks[7], (in_channels,))
    g2, be2 = unif(ks[8], (in_channels,)), nrm(ks[9], (in_channels,))
    m2, v2 = nrm(ks[10], (in_channels,)), unif(ks[11], (in_channels,))

    conv3_w = nrm(ks[12], (out_channels, in_channels, 1, 1))
    conv3_b = nrm(ks[13], (out_channels,))
    g3, be3 = unif(ks[14], (out_channels,)), nrm(ks[15], (out_channels,))
    m3, v3 = nrm(ks[16], (out_channels,)), unif(ks[17], (out_channels,))

    torch_params = dict(conv1_w=conv1_w, conv1_b=conv1_b, g1=g1, be1=be1, m1=m1, v1=v1,
                        conv2_w=conv2_w, conv2_b=conv2_b, g2=g2, be2=be2, m2=m2, v2=v2,
                        conv3_w=conv3_w, conv3_b=conv3_b, g3=g3, be3=be3, m3=m3, v3=v3,
                        groups=groups, eps=eps)

    # ---------------- fold into kernel parameters ----------------
    r = downsample_rate
    Hp, Wp = H // r, W // r
    N = Hp * Wp

    # inference-mode BN fold: bn(conv(x)) = (s * W) x + (s * (b_conv - mean) + beta)
    def fold_scale_bias(gamma, beta, mean, var, conv_bias):
        s = gamma / jnp.sqrt(var + eps)
        b = (conv_bias - mean) * s + beta
        return s, b.reshape(-1, 1).astype(jnp.float32)

    s1, b1 = fold_scale_bias(g1, be1, m1, v1, conv1_b)
    s2, b2 = fold_scale_bias(g2, be2, m2, v2, conv2_b)
    s3, b3 = fold_scale_bias(g3, be3, m3, v3, conv3_b)

    w1f = (s1[:, None] * conv1_w[:, :, 0, 0]).astype(jnp.bfloat16)   # (Cin, Cin)
    w3f = (s3[:, None] * conv3_w[:, :, 0, 0]).astype(jnp.bfloat16)   # (Cout, Cin)

    # grouped 3x3 conv -> dense im2col weight (Cin, 9*Cin); row o, col k*Cin+i
    w2_np = np.asarray(conv2_w)
    w2_im2col = np.zeros((in_channels, 9 * in_channels), np.float32)
    for o in range(in_channels):
        g = o // cpg
        for il in range(cpg):
            i = g * cpg + il
            for kh in range(3):
                for kw in range(3):
                    w2_im2col[o, (kh * 3 + kw) * in_channels + i] = w2_np[o, il, kh, kw]
    w2f = (jnp.asarray(w2_im2col) * s2[:, None]).astype(jnp.bfloat16)

    # tiny per-tap border masks over the flattened (Hp*Wp) spatial axis
    masks = np.zeros((9, 1, N), np.float32)
    for kh in range(3):
        for kw in range(3):
            dh, dw = kh - 1, kw - 1
            for h in range(Hp):
                for w in range(Wp):
                    if 0 <= h + dh < Hp and 0 <= w + dw < Wp:
                        masks[kh * 3 + kw, 0, h * Wp + w] = 1.0

    kernel_params = dict(
        masks=jnp.asarray(masks),
        w1=w1f, b1=b1,
        w2=w2f, b2=b2,
        w3=w3f, b3=b3,
    )
    return torch_params, kernel_params


# ---------------------------- pure-JAX reference -----------------------------
def hr_forward_reference(x_nchw, p, downsample_rate):
    eps = p["eps"]
    r = downsample_rate
    B, C, H, W = x_nchw.shape
    x = x_nchw.reshape(B, C, H // r, r, W // r, r).mean(axis=(3, 5))

    def bn(z, g, b, m, v):
        return (z - m[None, :, None, None]) / jnp.sqrt(v[None, :, None, None] + eps) \
               * g[None, :, None, None] + b[None, :, None, None]

    x = jnp.einsum('bchw,dc->bdhw', x, p["conv1_w"][:, :, 0, 0]) \
        + p["conv1_b"][None, :, None, None]
    x = jnp.maximum(bn(x, p["g1"], p["be1"], p["m1"], p["v1"]), 0.0)

    x = lax.conv_general_dilated(
        x, p["conv2_w"], window_strides=(1, 1), padding=((1, 1), (1, 1)),
        dimension_numbers=('NCHW', 'OIHW', 'NCHW'),
        feature_group_count=p["groups"]) + p["conv2_b"][None, :, None, None]
    x = bn(x, p["g2"], p["be2"], p["m2"], p["v2"])

    x = jnp.einsum('bchw,dc->bdhw', x, p["conv3_w"][:, :, 0, 0]) \
        + p["conv3_b"][None, :, None, None]
    x = jnp.maximum(bn(x, p["g3"], p["be3"], p["m3"], p["v3"]), 0.0)
    return x


if __name__ == "__main__":
    B, Cin, H, W = 2, 8, 16, 16
    Cout = 16
    downsample_rate = 2
    min_channels_of_a_grp = 4

    key = jax.random.PRNGKey(0)
    kx, kp = jax.random.split(key)
    x = jax.random.normal(kx, (B, Cin, H, W), jnp.float32)

    torch_params, kernel_params = make_params(
        kp, Cin, Cout, downsample_rate, min_channels_of_a_grp, H, W)

    out = hr_forward_pallas(x, kernel_params, downsample_rate)
    out = jax.block_until_ready(out)

    ref = hr_forward_reference(x, torch_params, downsample_rate)
    assert out.shape == (B, Cout, H // downsample_rate, W // downsample_rate), out.shape
    assert bool(jnp.allclose(out, ref, rtol=2e-2, atol=2e-2)), \
        f"max abs err = {float(jnp.max(jnp.abs(out - ref)))}"
    print("KERNEL_OK")
</pallas_src>

<mosaic_0001>
module attributes {stable_mosaic.version = 11 : i64} {
  func.func @_hr_kernel(%arg0: i32, %arg1: memref<1x4x8x64xf32, #tpu.memory_space<vmem>>, %arg2: memref<9x1x64xf32, #tpu.memory_space<vmem>>, %arg3: memref<8x8xbf16, #tpu.memory_space<vmem>>, %arg4: memref<8x1xf32, #tpu.memory_space<vmem>>, %arg5: memref<8x72xbf16, #tpu.memory_space<vmem>>, %arg6: memref<8x1xf32, #tpu.memory_space<vmem>>, %arg7: memref<16x8xbf16, #tpu.memory_space<vmem>>, %arg8: memref<16x1xf32, #tpu.memory_space<vmem>>, %arg9: memref<1x16x64xf32, #tpu.memory_space<vmem>>) attributes {dimension_semantics = [#tpu.dimension_semantics<parallel>], iteration_bounds = array<i64: 2>, scalar_prefetch = 0 : i64, scratch_operands = 0 : i64, tpu.core_type = #tpu.core_type<tc>, window_params = [{transform_indices = @transform_0, window_bounds = array<i64: 1, 4, 8, 64>}, {pipeline_mode = #tpu.pipeline_mode<synchronous>, transform_indices = @transform_1, window_bounds = array<i64: 9, 1, 64>}, {pipeline_mode = #tpu.pipeline_mode<synchronous>, transform_indices = @transform_2, window_bounds = array<i64: 8, 8>}, {pipeline_mode = #tpu.pipeline_mode<synchronous>, transform_indices = @transform_3, window_bounds = array<i64: 8, 1>}, {pipeline_mode = #tpu.pipeline_mode<synchronous>, transform_indices = @transform_4, window_bounds = array<i64: 8, 72>}, {pipeline_mode = #tpu.pipeline_mode<synchronous>, transform_indices = @transform_5, window_bounds = array<i64: 8, 1>}, {pipeline_mode = #tpu.pipeline_mode<synchronous>, transform_indices = @transform_6, window_bounds = array<i64: 16, 8>}, {pipeline_mode = #tpu.pipeline_mode<synchronous>, transform_indices = @transform_7, window_bounds = array<i64: 16, 1>}, {transform_indices = @transform_8, window_bounds = array<i64: 1, 16, 64>}]} {
    %c0 = arith.constant 0 : index
    %c0_0 = arith.constant 0 : index
    %c0_1 = arith.constant 0 : index
    %c0_2 = arith.constant 0 : index
    %0 = vector.load %arg1[%c0, %c0_0, %c0_1, %c0_2] : memref<1x4x8x64xf32, #tpu.memory_space<vmem>>, vector<1x1x8x64xf32>
    %1 = vector.shape_cast %0 : vector<1x1x8x64xf32> to vector<8x64xf32>
    %c0_3 = arith.constant 0 : index
    %c1 = arith.constant 1 : index
    %c0_4 = arith.constant 0 : index
    %c0_5 = arith.constant 0 : index
    %2 = vector.load %arg1[%c0_3, %c1, %c0_4, %c0_5] : memref<1x4x8x64xf32, #tpu.memory_space<vmem>>, vector<1x1x8x64xf32>
    %3 = vector.shape_cast %2 : vector<1x1x8x64xf32> to vector<8x64xf32>
    %4 = arith.addf %1, %3 : vector<8x64xf32>
    %c0_6 = arith.constant 0 : index
    %c2 = arith.constant 2 : index
    %c0_7 = arith.constant 0 : index
    %c0_8 = arith.constant 0 : index
    %5 = vector.load %arg1[%c0_6, %c2, %c0_7, %c0_8] : memref<1x4x8x64xf32, #tpu.memory_space<vmem>>, vector<1x1x8x64xf32>
    %6 = vector.shape_cast %5 : vector<1x1x8x64xf32> to vector<8x64xf32>
    %7 = arith.addf %4, %6 : vector<8x64xf32>
    %c0_9 = arith.constant 0 : index
    %c3 = arith.constant 3 : index
    %c0_10 = arith.constant 0 : index
    %c0_11 = arith.constant 0 : index
    %8 = vector.load %arg1[%c0_9, %c3, %c0_10, %c0_11] : memref<1x4x8x64xf32, #tpu.memory_space<vmem>>, vector<1x1x8x64xf32>
    %9 = vector.shape_cast %8 : vector<1x1x8x64xf32> to vector<8x64xf32>
    %10 = arith.addf %7, %9 : vector<8x64xf32>
    %cst = arith.constant 2.500000e-01 : f32
    %11 = vector.broadcast %cst : f32 to vector<8x64xf32>
    %12 = arith.mulf %10, %11 : vector<8x64xf32>
    %c0_12 = arith.constant 0 : index
    %c0_13 = arith.constant 0 : index
    %13 = vector.load %arg3[%c0_12, %c0_13] : memref<8x8xbf16, #tpu.memory_space<vmem>>, vector<8x8xbf16>
    %14 = arith.truncf %12 : vector<8x64xf32> to vector<8x64xbf16>
    %cst_14 = arith.constant dense<0.000000e+00> : vector<8x64xf32>
    %15 = tpu.matmul %13, %14, %cst_14 {dimension_numbers = #tpu.dot_dimension_numbers<[1], [0], [0], [1], [0, 0, 1, 1], [], []>} : vector<8x8xbf16>, vector<8x64xbf16>, vector<8x64xf32> -> vector<8x64xf32>
    %c0_15 = arith.constant 0 : index
    %c0_16 = arith.constant 0 : index
    %16 = vector.load %arg4[%c0_15, %c0_16] : memref<8x1xf32, #tpu.memory_space<vmem>>, vector<8x1xf32>
    %17 = vector.broadcast %16 : vector<8x1xf32> to vector<8x64xf32>
    %18 = arith.addf %15, %17 : vector<8x64xf32>
    %cst_17 = arith.constant 0.000000e+00 : f32
    %19 = vector.broadcast %cst_17 : f32 to vector<8x64xf32>
    %20 = arith.maximumf %18, %19 : vector<8x64xf32>
    %cst_18 = arith.constant 0.000000e+00 : f32
    %21 = vector.broadcast %cst_18 : f32 to vector<8x9xf32>
    %22 = tpu.concatenate %21, %20, %21 in 1 : vector<8x9xf32>, vector<8x64xf32>, vector<8x9xf32> -> vector<8x82xf32>
    %23 = vector.extract_strided_slice %22 {offsets = [0, 0], sizes = [8, 64], strides = [1, 1]} : vector<8x82xf32> to vector<8x64xf32>
    %c0_19 = arith.constant 0 : index
    %c0_20 = arith.constant 0 : index
    %c0_21 = arith.constant 0 : index
    %24 = vector.load %arg2[%c0_19, %c0_20, %c0_21] : memref<9x1x64xf32, #tpu.memory_space<vmem>>, vector<1x1x64xf32>
    %25 = vector.shape_cast %24 : vector<1x1x64xf32> to vector<1x64xf32>
    %26 = vector.broadcast %25 : vector<1x64xf32> to vector<8x64xf32>
    %27 = arith.mulf %23, %26 : vector<8x64xf32>
    %28 = vector.extract_strided_slice %22 {offsets = [0, 1], sizes = [8, 64], strides = [1, 1]} : vector<8x82xf32> to vector<8x64xf32>
    %c1_22 = arith.constant 1 : index
    %c0_23 = arith.constant 0 : index
    %c0_24 = arith.constant 0 : index
    %29 = vector.load %arg2[%c1_22, %c0_23, %c0_24] : memref<9x1x64xf32, #tpu.memory_space<vmem>>, vector<1x1x64xf32>
    %30 = vector.shape_cast %29 : vector<1x1x64xf32> to vector<1x64xf32>
    %31 = vector.broadcast %30 : vector<1x64xf32> to vector<8x64xf32>
    %32 = arith.mulf %28, %31 : vector<8x64xf32>
    %33 = vector.extract_strided_slice %22 {offsets = [0, 2], sizes = [8, 64], strides = [1, 1]} : vector<8x82xf32> to vector<8x64xf32>
    %c2_25 = arith.constant 2 : index
    %c0_26 = arith.constant 0 : index
    %c0_27 = arith.constant 0 : index
    %34 = vector.load %arg2[%c2_25, %c0_26, %c0_27] : memref<9x1x64xf32, #tpu.memory_space<vmem>>, vector<1x1x64xf32>
    %35 = vector.shape_cast %34 : vector<1x1x64xf32> to vector<1x64xf32>
    %36 = vector.broadcast %35 : vector<1x64xf32> to vector<8x64xf32>
    %37 = arith.mulf %33, %36 : vector<8x64xf32>
    %38 = vector.extract_strided_slice %22 {offsets = [0, 8], sizes = [8, 64], strides = [1, 1]} : vector<8x82xf32> to vector<8x64xf32>
    %c3_28 = arith.constant 3 : index
    %c0_29 = arith.constant 0 : index
    %c0_30 = arith.constant 0 : index
    %39 = vector.load %arg2[%c3_28, %c0_29, %c0_30] : memref<9x1x64xf32, #tpu.memory_space<vmem>>, vector<1x1x64xf32>
    %40 = vector.shape_cast %39 : vector<1x1x64xf32> to vector<1x64xf32>
    %41 = vector.broadcast %40 : vector<1x64xf32> to vector<8x64xf32>
    %42 = arith.mulf %38, %41 : vector<8x64xf32>
    %43 = vector.extract_strided_slice %22 {offsets = [0, 9], sizes = [8, 64], strides = [1, 1]} : vector<8x82xf32> to vector<8x64xf32>
    %44 = vector.extract_strided_slice %22 {offsets = [0, 10], sizes = [8, 64], strides = [1, 1]} : vector<8x82xf32> to vector<8x64xf32>
    %c5 = arith.constant 5 : index
    %c0_31 = arith.constant 0 : index
    %c0_32 = arith.constant 0 : index
    %45 = vector.load %arg2[%c5, %c0_31, %c0_32] : memref<9x1x64xf32, #tpu.memory_space<vmem>>, vector<1x1x64xf32>
    %46 = vector.shape_cast %45 : vector<1x1x64xf32> to vector<1x64xf32>
    %47 = vector.broadcast %46 : vector<1x64xf32> to vector<8x64xf32>
    %48 = arith.mulf %44, %47 : vector<8x64xf32>
    %49 = vector.extract_strided_slice %22 {offsets = [0, 16], sizes = [8, 64], strides = [1, 1]} : vector<8x82xf32> to vector<8x64xf32>
    %c6 = arith.constant 6 : index
    %c0_33 = arith.constant 0 : index
    %c0_34 = arith.constant 0 : index
    %50 = vector.load %arg2[%c6, %c0_33, %c0_34] : memref<9x1x64xf32, #tpu.memory_space<vmem>>, vector<1x1x64xf32>
    %51 = vector.shape_cast %50 : vector<1x1x64xf32> to vector<1x64xf32>
    %52 = vector.broadcast %51 : vector<1x64xf32> to vector<8x64xf32>
    %53 = arith.mulf %49, %52 : vector<8x64xf32>
    %54 = vector.extract_strided_slice %22 {offsets = [0, 17], sizes = [8, 64], strides = [1, 1]} : vector<8x82xf32> to vector<8x64xf32>
    %c7 = arith.constant 7 : index
    %c0_35 = arith.constant 0 : index
    %c0_36 = arith.constant 0 : index
    %55 = vector.load %arg2[%c7, %c0_35, %c0_36] : memref<9x1x64xf32, #tpu.memory_space<vmem>>, vector<1x1x64xf32>
    %56 = vector.shape_cast %55 : vector<1x1x64xf32> to vector<1x64xf32>
    %57 = vector.broadcast %56 : vector<1x64xf32> to vector<8x64xf32>
    %58 = arith.mulf %54, %57 : vector<8x64xf32>
    %59 = vector.extract_strided_slice %22 {offsets = [0, 18], sizes = [8, 64], strides = [1, 1]} : vector<8x82xf32> to vector<8x64xf32>
    %c8 = arith.constant 8 : index
    %c0_37 = arith.constant 0 : index
    %c0_38 = arith.constant 0 : index
    %60 = vector.load %arg2[%c8, %c0_37, %c0_38] : memref<9x1x64xf32, #tpu.memory_space<vmem>>, vector<1x1x64xf32>
    %61 = vector.shape_cast %60 : vector<1x1x64xf32> to vector<1x64xf32>
    %62 = vector.broadcast %61 : vector<1x64xf32> to vector<8x64xf32>
    %63 = arith.mulf %59, %62 : vector<8x64xf32>
    %64 = tpu.concatenate %27, %32, %37, %42, %43, %48, %53, %58, %63 in 0 : vector<8x64xf32>, vector<8x64xf32>, vector<8x64xf32>, vector<8x64xf32>, vector<8x64xf32>, vector<8x64xf32>, vector<8x64xf32>, vector<8x64xf32>, vector<8x64xf32> -> vector<72x64xf32>
    %65 = arith.truncf %64 : vector<72x64xf32> to vector<72x64xbf16>
    %c0_39 = arith.constant 0 : index
    %c0_40 = arith.constant 0 : index
    %66 = vector.load %arg5[%c0_39, %c0_40] : memref<8x72xbf16, #tpu.memory_space<vmem>>, vector<8x72xbf16>
    %cst_41 = arith.constant dense<0.000000e+00> : vector<8x64xf32>
    %67 = tpu.matmul %66, %65, %cst_41 {dimension_numbers = #tpu.dot_dimension_numbers<[1], [0], [0], [1], [0, 0, 1, 1], [], []>} : vector<8x72xbf16>, vector<72x64xbf16>, vector<8x64xf32> -> vector<8x64xf32>
    %c0_42 = arith.constant 0 : index
    %c0_43 = arith.constant 0 : index
    %68 = vector.load %arg6[%c0_42, %c0_43] : memref<8x1xf32, #tpu.memory_space<vmem>>, vector<8x1xf32>
    %69 = vector.broadcast %68 : vector<8x1xf32> to vector<8x64xf32>
    %70 = arith.addf %67, %69 : vector<8x64xf32>
    %c0_44 = arith.constant 0 : index
    %c0_45 = arith.constant 0 : index
    %71 = vector.load %arg7[%c0_44, %c0_45] : memref<16x8xbf16, #tpu.memory_space<vmem>>, vector<16x8xbf16>
    %72 = arith.truncf %70 : vector<8x64xf32> to vector<8x64xbf16>
    %cst_46 = arith.constant dense<0.000000e+00> : vector<16x64xf32>
    %73 = tpu.matmul %71, %72, %cst_46 {dimension_numbers = #tpu.dot_dimension_numbers<[1], [0], [0], [1], [0, 0, 1, 1], [], []>} : vector<16x8xbf16>, vector<8x64xbf16>, vector<16x64xf32> -> vector<16x64xf32>
    %c0_47 = arith.constant 0 : index
    %c0_48 = arith.constant 0 : index
    %74 = vector.load %arg8[%c0_47, %c0_48] : memref<16x1xf32, #tpu.memory_space<vmem>>, vector<16x1xf32>
    %75 = vector.broadcast %74 : vector<16x1xf32> to vector<16x64xf32>
    %76 = arith.addf %73, %75 : vector<16x64xf32>
    %cst_49 = arith.constant 0.000000e+00 : f32
    %77 = vector.broadcast %cst_49 : f32 to vector<16x64xf32>
    %78 = arith.maximumf %76, %77 : vector<16x64xf32>
    %c0_50 = arith.constant 0 : index
    %c0_51 = arith.constant 0 : index
    %c0_52 = arith.constant 0 : index
    %79 = vector.load %arg9[%c0_50, %c0_51, %c0_52] : memref<1x16x64xf32, #tpu.memory_space<vmem>>, vector<1x16x64xf32>
    %80 = vector.shape_cast %79 : vector<1x16x64xf32> to vector<16x64xf32>
    %81 = vector.shape_cast %78 : vector<16x64xf32> to vector<1x16x64xf32>
    tpu.vector_store %arg9[%c0_50, %c0_51, %c0_52], %81 {strides = array<i32>} : memref<1x16x64xf32, #tpu.memory_space<vmem>>, vector<1x16x64xf32>,
    return
  }
  func.func @transform_0(%arg0: i32) -> (i32, i32, i32, i32) {
    %c0_i32 = arith.constant 0 : i32
    %c0_i32_0 = arith.constant 0 : i32
    %c0_i32_1 = arith.constant 0 : i32
    %c0_i32_2 = arith.constant 0 : i32
    return %arg0, %c0_i32, %c0_i32_0, %c0_i32_1 : i32, i32, i32, i32
  }
  func.func @transform_1(%arg0: i32) -> (i32, i32, i32) {
    %c0_i32 = arith.constant 0 : i32
    %c0_i32_0 = arith.constant 0 : i32
    %c0_i32_1 = arith.constant 0 : i32
    %c0_i32_2 = arith.constant 0 : i32
    return %c0_i32, %c0_i32_0, %c0_i32_1 : i32, i32, i32
  }
  func.func @transform_2(%arg0: i32) -> (i32, i32) {
    %c0_i32 = arith.constant 0 : i32
    %c0_i32_0 = arith.constant 0 : i32
    %c0_i32_1 = arith.constant 0 : i32
    return %c0_i32, %c0_i32_0 : i32, i32
  }
  func.func @transform_3(%arg0: i32) -> (i32, i32) {
    %c0_i32 = arith.constant 0 : i32
    %c0_i32_0 = arith.constant 0 : i32
    %c0_i32_1 = arith.constant 0 : i32
    return %c0_i32, %c0_i32_0 : i32, i32
  }
  func.func @transform_4(%arg0: i32) -> (i32, i32) {
    %c0_i32 = arith.constant 0 : i32
    %c0_i32_0 = arith.constant 0 : i32
    %c0_i32_1 = arith.constant 0 : i32
    return %c0_i32, %c0_i32_0 : i32, i32
  }
  func.func @transform_5(%arg0: i32) -> (i32, i32) {
    %c0_i32 = arith.constant 0 : i32
    %c0_i32_0 = arith.constant 0 : i32
    %c0_i32_1 = arith.constant 0 : i32
    return %c0_i32, %c0_i32_0 : i32, i32
  }
  func.func @transform_6(%arg0: i32) -> (i32, i32) {
    %c0_i32 = arith.constant 0 : i32
    %c0_i32_0 = arith.constant 0 : i32
    %c0_i32_1 = arith.constant 0 : i32
    return %c0_i32, %c0_i32_0 : i32, i32
  }
  func.func @transform_7(%arg0: i32) -> (i32, i32) {
    %c0_i32 = arith.constant 0 : i32
    %c0_i32_0 = arith.constant 0 : i32
    %c0_i32_1 = arith.constant 0 : i32
    return %c0_i32, %c0_i32_0 : i32, i32
  }
  func.func @transform_8(%arg0: i32) -> (i32, i32, i32) {
    %c0_i32 = arith.constant 0 : i32
    %c0_i32_0 = arith.constant 0 : i32
    %c0_i32_1 = arith.constant 0 : i32
    return %arg0, %c0_i32, %c0_i32_0 : i32, i32, i32
  }
}

</mosaic_0001>

<llo_original>
// kernel: tpu_custom_call.1
$region0: #{tpu_custom_call.1}
  #allocation0 [shape = 'u32[]', space=smem, size = 0x4, offset = 0x4, fixed_abs, tag = 'smem constant byte address 0x4 - core index']
  #allocation1 [shape = 'u32[72,128]{1,0:T(1,128)}', space=vmem, size = 0x9000, scoped, tag = 'internal scratch']
  %s0 = inlined_call_operand.hbm [shape: f32[2,4,8,64], index: 0, kind: input, shape index: {}]
  %s1 = inlined_call_operand.vmem [shape: f32[9,1,64], index: 1, kind: input, shape index: {}]
  %s2 = inlined_call_operand.vmem [shape: bf16[8,8], index: 2, kind: input, shape index: {}]
  %s3 = inlined_call_operand.vmem [shape: f32[8,1], index: 3, kind: input, shape index: {}]
  %s4 = inlined_call_operand.vmem [shape: bf16[8,72], index: 4, kind: input, shape index: {}]
  %s5 = inlined_call_operand.vmem [shape: f32[8,1], index: 5, kind: input, shape index: {}]
  %s6 = inlined_call_operand.vmem [shape: bf16[16,8], index: 6, kind: input, shape index: {}]
  %s7 = inlined_call_operand.vmem [shape: f32[16,1], index: 7, kind: input, shape index: {}]
  %s8 = inlined_call_operand.hbm [shape: f32[2,16,64], index: 8, kind: output, shape index: {}]
  %s9 = sld [smem:[#allocation0]]
  $region69: #{tpu_custom_call.1} parent=0
    _
  %s11 = ssub.s32 1, %s9
  %s12 = scalar_select 0, %s11, %s9
  $region1: #{tpu_custom_call.1} parent=0
    #allocation2 [shape = 'u8[32768]{0}', space=vmem, size = 0x8000, scoped, tag = 'input window, operand 0']
    #allocation3 [shape = 's32[2]{0}', space=sflag, size = 0x8, scoped, tag = 'scoped memory for tpu_custom_call.1']
    #allocation4 [shape = 's32[2]{0}', space=sflag, size = 0x8, scoped, tag = 'scoped memory for tpu_custom_call.1']
    #allocation5 [shape = 'u8[16384]{0}', space=vmem, size = 0x4000, scoped, tag = 'output window, operand 0']
    %13 = vsyncpa [#allocation3], 0
    %s14 = scalar_lea.sflag [#allocation3], 1
    %15 = vsyncpa %s14, 0
    %16 = vsyncpa [#allocation4], 0
    %s17 = scalar_lea.sflag [#allocation4], 1
    %18 = vsyncpa %s17, 0
    loop: start=0, step=1, limit=4
    $region2: #{tpu_custom_call.1} parent=1 // loop_pre_header
      _
    $region3: #{tpu_custom_call.1} parent=1 // loop_header
      %s20 = sphi 0, %s24
      %p21 = scmp.ge.s32.totalorder %s20, 4
      %s30 = sphi 0, %s32
      %s33 = sphi 0, %s30
      %s34 = sphi 0, %s33
      %s50 = sphi 0, %s34
      %s54 = sphi 0, %s54
      %s56 = sphi 0, %s54
      %s57 = sphi 0, %s56
      %s71 = sphi 0, %s57
      %s75 = sphi 0, %s75
      %s77 = sphi 0, %s75
      %s78 = sphi 0, %s77
      %s92 = sphi 0, %s78
      %s96 = sphi 0, %s96
      %s98 = sphi 0, %s96
      %s99 = sphi 0, %s98
      %s113 = sphi 0, %s99
      %s117 = sphi 0, %s117
      %s119 = sphi 0, %s117
      %s120 = sphi 0, %s119
      %s134 = sphi 0, %s120
      %s138 = sphi 0, %s138
      %s140 = sphi 0, %s138
      %s141 = sphi 0, %s140
      %s155 = sphi 0, %s141
      %s159 = sphi 0, %s159
      %s161 = sphi 0, %s159
      %s162 = sphi 0, %s161
      %s176 = sphi 0, %s162
      %s180 = sphi 0, %s180
      %s182 = sphi 0, %s180
      %s183 = sphi 0, %s182
      %s197 = sphi 0, %s183
      %s203 = sphi 0, %s205
      %s206 = sphi 0, %s203
      %s207 = sphi 0, %s206
      %s223 = sphi 0, %s207
    $region4: #{tpu_custom_call.1} parent=1 // loop_header_branch
      %23 = sbr.rel (%p21) target = $region8
    $region5: #{tpu_custom_call.1} parent=1 // loop_body
      %s25 = ssub.s32 %s20, 1
      %s26 = ssub.s32 %s20, 2
      %s27 = sadd.s32 %s20, 1
      %s28 = ssub.s32 %s20, %s27
      %p29 = scmp.eq.s32.totalorder %s28, 0
      %s31 = sadd.s32 %s30, 1
      %s32 = scalar_select %p29, %s30, %s31
      %p35 = pneg %p29
      %p36 = scmp.eq.s32.totalorder %s20, 1
      %p37 = por %p35, %p36
      %p38 = scmp.ne.s32.totalorder %s30, %s33
      %p39 = scmp.eq.s32.totalorder %s20, 0
      %p40 = por %p38, %p39
      %p41 = scmp.ne.s32.totalorder %s30, %s33
      %p42 = scmp.eq.s32.totalorder %s25, 1
      %p43 = por %p41, %p42
      %p44 = scmp.ne.s32.totalorder %s33, %s34
      %p45 = scmp.eq.s32.totalorder %s25, 0
      %p46 = por %p44, %p45
      %p47 = scmp.ne.s32.totalorder %s33, %s34
      %p48 = scmp.eq.s32.totalorder %s26, 1
      %p49 = por %p47, %p48
      %p51 = scmp.ne.s32.totalorder %s34, %s50
      %p52 = scmp.eq.s32.totalorder %s26, 0
      %p53 = por %p51, %p52
      %s55 = sadd.s32 %s54, 1
      %p58 = scmp.eq.s32.totalorder %s20, 1
      %p59 = scmp.ne.s32.totalorder %s54, %s56
      %p60 = scmp.eq.s32.totalorder %s20, 0
      %p61 = por %p59, %p60
      %p62 = scmp.ne.s32.totalorder %s54, %s56
      %p63 = scmp.eq.s32.totalorder %s25, 1
      %p64 = por %p62, %p63
      %p65 = scmp.ne.s32.totalorder %s56, %s57
      %p66 = scmp.eq.s32.totalorder %s25, 0
      %p67 = por %p65, %p66
      %p68 = scmp.ne.s32.totalorder %s56, %s57
      %p69 = scmp.eq.s32.totalorder %s26, 1
      %p70 = por %p68, %p69
      %p72 = scmp.ne.s32.totalorder %s57, %s71
      %p73 = scmp.eq.s32.totalorder %s26, 0
      %p74 = por %p72, %p73
      %s76 = sadd.s32 %s75, 1
      %p79 = scmp.eq.s32.totalorder %s20, 1
      %p80 = scmp.ne.s32.totalorder %s75, %s77
      %p81 = scmp.eq.s32.totalorder %s20, 0
      %p82 = por %p80, %p81
      %p83 = scmp.ne.s32.totalorder %s75, %s77
      %p84 = scmp.eq.s32.totalorder %s25, 1
      %p85 = por %p83, %p84
      %p86 = scmp.ne.s32.totalorder %s77, %s78
      %p87 = scmp.eq.s32.totalorder %s25, 0
      %p88 = por %p86, %p87
      %p89 = scmp.ne.s32.totalorder %s77, %s78
      %p90 = scmp.eq.s32.totalorder %s26, 1
      %p91 = por %p89, %p90
      %p93 = scmp.ne.s32.totalorder %s78, %s92
      %p94 = scmp.eq.s32.totalorder %s26, 0
      %p95 = por %p93, %p94
      %s97 = sadd.s32 %s96, 1
      %p100 = scmp.eq.s32.totalorder %s20, 1
      %p101 = scmp.ne.s32.totalorder %s96, %s98
      %p102 = scmp.eq.s32.totalorder %s20, 0
      %p103 = por %p101, %p102
      %p104 = scmp.ne.s32.totalorder %s96, %s98
      %p105 = scmp.eq.s32.totalorder %s25, 1
      %p106 = por %p104, %p105
      %p107 = scmp.ne.s32.totalorder %s98, %s99
      %p108 = scmp.eq.s32.totalorder %s25, 0
      %p109 = por %p107, %p108
      %p110 = scmp.ne.s32.totalorder %s98, %s99
      %p111 = scmp.eq.s32.totalorder %s26, 1
      %p112 = por %p110, %p111
      %p114 = scmp.ne.s32.totalorder %s99, %s113
      %p115 = scmp.eq.s32.totalorder %s26, 0
      %p116 = por %p114, %p115
      %s118 = sadd.s32 %s117, 1
      %p121 = scmp.eq.s32.totalorder %s20, 1
      %p122 = scmp.ne.s32.totalorder %s117, %s119
      %p123 = scmp.eq.s32.totalorder %s20, 0
      %p124 = por %p122, %p123
      %p125 = scmp.ne.s32.totalorder %s117, %s119
      %p126 = scmp.eq.s32.totalorder %s25, 1
      %p127 = por %p125, %p126
      %p128 = scmp.ne.s32.totalorder %s119, %s120
      %p129 = scmp.eq.s32.totalorder %s25, 0
      %p130 = por %p128, %p129
      %p131 = scmp.ne.s32.totalorder %s119, %s120
      %p132 = scmp.eq.s32.totalorder %s26, 1
      %p133 = por %p131, %p132
      %p135 = scmp.ne.s32.totalorder %s120, %s134
      %p136 = scmp.eq.s32.totalorder %s26, 0
      %p137 = por %p135, %p136
      %s139 = sadd.s32 %s138, 1
      %p142 = scmp.eq.s32.totalorder %s20, 1
      %p143 = scmp.ne.s32.totalorder %s138, %s140
      %p144 = scmp.eq.s32.totalorder %s20, 0
      %p145 = por %p143, %p144
      %p146 = scmp.ne.s32.totalorder %s138, %s140
      %p147 = scmp.eq.s32.totalorder %s25, 1
      %p148 = por %p146, %p147
      %p149 = scmp.ne.s32.totalorder %s140, %s141
      %p150 = scmp.eq.s32.totalorder %s25, 0
      %p151 = por %p149, %p150
      %p152 = scmp.ne.s32.totalorder %s140, %s141
      %p153 = scmp.eq.s32.totalorder %s26, 1
      %p154 = por %p152, %p153
      %p156 = scmp.ne.s32.totalorder %s141, %s155
      %p157 = scmp.eq.s32.totalorder %s26, 0
      %p158 = por %p156, %p157
      %s160 = sadd.s32 %s159, 1
      %p163 = scmp.eq.s32.totalorder %s20, 1
      %p164 = scmp.ne.s32.totalorder %s159, %s161
      %p165 = scmp.eq.s32.totalorder %s20, 0
      %p166 = por %p164, %p165
      %p167 = scmp.ne.s32.totalorder %s159, %s161
      %p168 = scmp.eq.s32.totalorder %s25, 1
      %p169 = por %p167, %p168
      %p170 = scmp.ne.s32.totalorder %s161, %s162
      %p171 = scmp.eq.s32.totalorder %s25, 0
      %p172 = por %p170, %p171
      %p173 = scmp.ne.s32.totalorder %s161, %s162
      %p174 = scmp.eq.s32.totalorder %s26, 1
      %p175 = por %p173, %p174
      %p177 = scmp.ne.s32.totalorder %s162, %s176
      %p178 = scmp.eq.s32.totalorder %s26, 0
      %p179 = por %p177, %p178
      %s181 = sadd.s32 %s180, 1
      %p184 = scmp.eq.s32.totalorder %s20, 1
      %p185 = scmp.ne.s32.totalorder %s180, %s182
      %p186 = scmp.eq.s32.totalorder %s20, 0
      %p187 = por %p185, %p186
      %p188 = scmp.ne.s32.totalorder %s180, %s182
      %p189 = scmp.eq.s32.totalorder %s25, 1
      %p190 = por %p188, %p189
      %p191 = scmp.ne.s32.totalorder %s182, %s183
      %p192 = scmp.eq.s32.totalorder %s25, 0
      %p193 = por %p191, %p192
      %p194 = scmp.ne.s32.totalorder %s182, %s183
      %p195 = scmp.eq.s32.totalorder %s26, 1
      %p196 = por %p194, %p195
      %p198 = scmp.ne.s32.totalorder %s183, %s197
      %p199 = scmp.eq.s32.totalorder %s26, 0
      %p200 = por %p198, %p199
      %s201 = ssub.s32 %s20, %s27
      %p202 = scmp.eq.s32.totalorder %s201, 0
      %s204 = sadd.s32 %s203, 1
      %s205 = scalar_select %p202, %s203, %s204
      %p208 = pneg %p202
      %p209 = scmp.eq.s32.totalorder %s20, 1
      %p210 = por %p208, %p209
      %p211 = scmp.ne.s32.totalorder %s203, %s206
      %p212 = scmp.eq.s32.totalorder %s20, 0
      %p213 = por %p211, %p212
      %p214 = scmp.ne.s32.totalorder %s203, %s206
      %p215 = scmp.eq.s32.totalorder %s25, 1
      %p216 = por %p214, %p215
      %p217 = scmp.ne.s32.totalorder %s206, %s207
      %p218 = scmp.eq.s32.totalorder %s25, 0
      %p219 = por %p217, %p218
      %p220 = scmp.ne.s32.totalorder %s206, %s207
      %p221 = scmp.eq.s32.totalorder %s26, 1
      %p222 = por %p220, %p221
      %p224 = scmp.ne.s32.totalorder %s207, %s223
      %p225 = scmp.eq.s32.totalorder %s26, 0
      %p226 = por %p224, %p225
      %p227 = scmp.le.s32.totalorder 1, %s20
      %p228 = scmp.lt.s32.totalorder %s20, 3
      %p229 = pnand %p227, %p228
      %p230 = pneg %p229
      // Predicated region
      $region9: #{tpu_custom_call.1} parent=5 // pred_check
        _
      $region10: #{tpu_custom_call.1} parent=5 // pred_check_branch
        %232 = sbr.rel (%p229) target = $region12
      $region11: #{tpu_custom_call.1} parent=5 // pred_region
        %s233 = ssub.s32 %s20, 1
        // Predicated region
        $region13: #{tpu_custom_call.1} parent=11 // pred_check
          %p234 = pneg %p67
        $region14: #{tpu_custom_call.1} parent=11 // pred_check_branch
          %236 = sbr.rel (%p234) target = $region16
        $region15: #{tpu_custom_call.1} parent=11 // pred_region
          _
        $region16: #{tpu_custom_call.1} parent=11 // pred_fallthru
          _
        // Predicated region
        $region17: #{tpu_custom_call.1} parent=11 // pred_check
          %p237 = pneg %p88
        $region18: #{tpu_custom_call.1} parent=11 // pred_check_branch
          %239 = sbr.rel (%p237) target = $region20
        $region19: #{tpu_custom_call.1} parent=11 // pred_region
          _
        $region20: #{tpu_custom_call.1} parent=11 // pred_fallthru
          _
        // Predicated region
        $region21: #{tpu_custom_call.1} parent=11 // pred_check
          %p240 = pneg %p109
        $region22: #{tpu_custom_call.1} parent=11 // pred_check_branch
          %242 = sbr.rel (%p240) target = $region24
        $region23: #{tpu_custom_call.1} parent=11 // pred_region
          _
        $region24: #{tpu_custom_call.1} parent=11 // pred_fallthru
          _
        // Predicated region
        $region25: #{tpu_custom_call.1} parent=11 // pred_check
          %p243 = pneg %p130
        $region26: #{tpu_custom_call.1} parent=11 // pred_check_branch
          %245 = sbr.rel (%p243) target = $region28
        $region27: #{tpu_custom_call.1} parent=11 // pred_region
          _
        $region28: #{tpu_custom_call.1} parent=11 // pred_fallthru
          _
        // Predicated region
        $region29: #{tpu_custom_call.1} parent=11 // pred_check
          %p246 = pneg %p151
        $region30: #{tpu_custom_call.1} parent=11 // pred_check_branch
          %248 = sbr.rel (%p246) target = $region32
        $region31: #{tpu_custom_call.1} parent=11 // pred_region
          _
        $region32: #{tpu_custom_call.1} parent=11 // pred_fallthru
          _
        // Predicated region
        $region33: #{tpu_custom_call.1} parent=11 // pred_check
          %p249 = pneg %p172
        $region34: #{tpu_custom_call.1} parent=11 // pred_check_branch
          %251 = sbr.rel (%p249) target = $region36
        $region35: #{tpu_custom_call.1} parent=11 // pred_region
          _
        $region36: #{tpu_custom_call.1} parent=11 // pred_fallthru
          _
        // Predicated region
        $region37: #{tpu_custom_call.1} parent=11 // pred_check
          %p252 = pneg %p193
        $region38: #{tpu_custom_call.1} parent=11 // pred_check_branch
          %254 = sbr.rel (%p252) target = $region40
        $region39: #{tpu_custom_call.1} parent=11 // pred_region
          _
        $region40: #{tpu_custom_call.1} parent=11 // pred_fallthru
          _
      $region12: #{tpu_custom_call.1} parent=5 // pred_fallthru
        _
      %p255 = scmp.lt.s32.totalorder %s20, 2
      // Predicated region
      $region41: #{tpu_custom_call.1} parent=5 // pred_check
        %p256 = pneg %p255
      $region42: #{tpu_custom_call.1} parent=5 // pred_check_branch
        %258 = sbr.rel (%p256) target = $region44
      $region43: #{tpu_custom_call.1} parent=5 // pred_region
        // Predicated region
        $region45: #{tpu_custom_call.1} parent=43 // pred_check
          %p259 = pneg %p40
        $region46: #{tpu_custom_call.1} parent=43 // pred_check_branch
          %261 = sbr.rel (%p259) target = $region48
        $region47: #{tpu_custom_call.1} parent=43 // pred_region
          %s262 = sand.u32 %s30, 1
          %s263 = scalar_lea.sflag [#allocation3], %s262
          %s264 = sand.u32 %s30, 1
          %s265 = smul.addr %s264, 32
          %s266 = scalar_lea.vmem [#allocation2], %s265
          %268 = vsyncadd %s263, 0
          %s269 = smul.addr %s20, 4
          %s270 = smul.addr %s269, 8
          %s271 = scalar_lea.hbm %s0, %s270
          %s272 = sshll.u32 %s271, 4
          %s273 = int_to_ptr.hbm [resolvable:$true] %s272
          %s274 = sshll.u32 %s266, 4
          %s275 = int_to_ptr.vmem [resolvable:$true] %s274
          %280 = dma.hbm_to_vmem [thread:$0]  %s273, 512, %s275, %s263, 128, 128, 8
        $region48: #{tpu_custom_call.1} parent=43 // pred_fallthru
          _
      $region44: #{tpu_custom_call.1} parent=5 // pred_fallthru
        _
      %p281 = scmp.le.s32.totalorder 1, %s20
      %p282 = scmp.lt.s32.totalorder %s20, 3
      %p283 = pnand %p281, %p282
      %p284 = pneg %p283
      // Predicated region
      $region49: #{tpu_custom_call.1} parent=5 // pred_check
        _
      $region50: #{tpu_custom_call.1} parent=5 // pred_check_branch
        %286 = sbr.rel (%p283) target = $region52
      $region51: #{tpu_custom_call.1} parent=5 // pred_region
        %s287 = ssub.s32 %s20, 1
        %s288 = sand.u32 %s33, 1
        %s289 = scalar_lea.sflag [#allocation3], %s288
        %s290 = sand.u32 %s33, 1
        %s291 = smul.addr %s290, 32
        %s292 = scalar_lea.vmem [#allocation2], %s291
        // Predicated region
        $region53: #{tpu_custom_call.1} parent=51 // pred_check
          %p293 = pneg %p46
        $region54: #{tpu_custom_call.1} parent=51 // pred_check_branch
          %295 = sbr.rel (%p293) target = $region56
        $region55: #{tpu_custom_call.1} parent=51 // pred_region
          %297 = dma.done %s289, 512
        $region56: #{tpu_custom_call.1} parent=51 // pred_fallthru
          _
        %s298 = sand.u32 %s33, 1
        %s299 = scalar_lea.sflag [#allocation3], %s298
        %s300 = sand.u32 %s33, 1
        %s301 = smul.addr %s300, 32
        %s302 = scalar_lea.vmem [#allocation2], %s301
        %p303 = pneg %p46
        %p304 = pneg %p43
        %p305 = pneg %p67
        %p306 = pneg %p64
        %p307 = pneg %p88
        %p308 = pneg %p85
        %p309 = pneg %p109
        %p310 = pneg %p106
        %p311 = pneg %p130
        %p312 = pneg %p127
        %p313 = pneg %p151
        %p314 = pneg %p148
        %p315 = pneg %p172
        %p316 = pneg %p169
        %p317 = pneg %p193
        %p318 = pneg %p190
        %p319 = pneg %p219
        %p320 = pneg %p216
        %s321 = sand.u32 %s206, 1
        %s322 = scalar_lea.sflag [#allocation4], %s321
        %s323 = sand.u32 %s206, 1
        %s324 = smul.addr %s323, 16
        %s325 = scalar_lea.vmem [#allocation5], %s324
        %v327 = vld [vmem:[%s292] sm:$0xff]
        %s328 = scalar_lea.vmem %s292, 8 [#allocation2]
        %v329 = vld [vmem:[%s328] sm:$0xff]
        %v330 = vadd.f32 %v327, %v329
        %s331 = scalar_lea.vmem %s292, 16 [#allocation2]
        %v332 = vld [vmem:[%s331] sm:$0xff]
        %v333 = vadd.f32 %v330, %v332
        %s334 = scalar_lea.vmem %s292, 24 [#allocation2]
        %v335 = vld [vmem:[%s334] sm:$0xff]
        %v336 = vadd.f32 %v333, %v335
        %v337 = vmul.f32 %v336, 0.25
        %v338 = vld [vmem:[%s2] sm:$0xf]
        %v339 = vpack.c.bf16 %v337, %v337
        %v340 = vld [vmem:[%s3] sm:$0xff]
        %342 = vset.pattern.permute.xlu0 0
        %343 = vperm.xlu0 %342, %v340
        %v344 = vpop.permute.xlu0 %343
        %vm346 = vcmask 64512
        %v348 = vsel %vm346, %v338, 0
        %vm350 = vcmask 1043456
        %v352 = vsel %vm350, %v339, 0
        %354 = vmatpush.bf16.msra.mxu0 0
        %355 = vmatpush.bf16.msra.mxu0 0
        %356 = vmatpush.bf16.msra.mxu0 0
        %357 = vmatpush.bf16.msra.mxu0 0
        %358 = vmatpush.bf16.msra.mxu0 0
        %359 = vmatpush.bf16.msra.mxu0 0
        %360 = vmatpush.bf16.msra.mxu0 0
        %361 = vmatpush.bf16.msra.mxu0 %v352
        %362 = vmatmul.bf16.gmra.mxu0 %v348
        %v363 = vpop.f32.mrf.mxu0
        %v364 = vadd.f32 %v344, %v363
        %v365 = vpop.f32.mrf.mxu0
        %366 = vdwg.mxu0
        %v367 = vmax.f32 %v364, 0.0
        %369 = vrot.lane.b32.xlu0 %v367, 9
        %v370 = vpop.permute.xlu0 %369
        %vm372 = vcmask 72704
        %v373 = vsel %vm372, 0.0, %v370
        %vm374 = vcmask 596992
        %v375 = vsel %vm374, %v373, 0.0
        %v376 = vld [vmem:[%s1] sm:$0x1]
        %v378 = vperm.slane %v376, 0
        %v380 = vmul.f32 %v375, %v378
        %s381 = scalar_lea.vmem %s1, 1
        %v382 = vld [vmem:[%s381] sm:$0x1]
        %v384 = vperm.slane %v382, 0
        %385 = vrot.lane.b32.xlu0 %v384, 1
        %v386 = vpop.permute.xlu0 %385
        %v388 = vmul.f32 %v375, %v386
        %s389 = scalar_lea.vmem %s1, 2
        %v390 = vld [vmem:[%s389] sm:$0x1]
        %v392 = vperm.slane %v390, 0
        %393 = vrot.lane.b32.xlu0 %v392, 2
        %v394 = vpop.permute.xlu0 %393
        %v396 = vmul.f32 %v375, %v394
        %s397 = scalar_lea.vmem %s1, 3
        %v398 = vld [vmem:[%s397] sm:$0x1]
        %v400 = vperm.slane %v398, 0
        %401 = vrot.lane.b32.xlu0 %v400, 8
        %v402 = vpop.permute.xlu0 %401
        %v404 = vmul.f32 %v375, %v402
        %s405 = scalar_lea.vmem %s1, 5
        %v406 = vld [vmem:[%s405] sm:$0x1]
        %v408 = vperm.slane %v406, 0
        %409 = vrot.lane.b32.xlu0 %v408, 10
        %v410 = vpop.permute.xlu0 %409
        %v412 = vmul.f32 %v375, %v410
        %s413 = scalar_lea.vmem %s1, 6
        %v414 = vld [vmem:[%s413] sm:$0x1]
        %v416 = vperm.slane %v414, 0
        %417 = vrot.lane.b32.xlu0 %v416, 16
        %v418 = vpop.permute.xlu0 %417
        %v420 = vmul.f32 %v375, %v418
        %s421 = scalar_lea.vmem %s1, 7
        %v422 = vld [vmem:[%s421] sm:$0x1]
        %v424 = vperm.slane %v422, 0
        %425 = vrot.lane.b32.xlu0 %v424, 17
        %v426 = vpop.permute.xlu0 %425
        %v428 = vmul.f32 %v375, %v426
        %s429 = scalar_lea.vmem %s1, 8
        %v430 = vld [vmem:[%s429] sm:$0x1]
        %v432 = vperm.slane %v430, 0
        %433 = vrot.lane.b32.xlu0 %v432, 18
        %v434 = vpop.permute.xlu0 %433
        %v436 = vmul.f32 %v375, %v434
        %438 = vrot.lane.b32.xlu0 %v388, 127
        %v439 = vpop.permute.xlu0 %438
        %442 = vrot.lane.b32.xlu0 %v396, 126
        %v443 = vpop.permute.xlu0 %442
        %446 = vrot.lane.b32.xlu0 %v404, 120
        %v447 = vpop.permute.xlu0 %446
        %450 = vrot.lane.b32.xlu0 %v375, 119
        %v451 = vpop.permute.xlu0 %450
        %454 = vrot.lane.b32.xlu0 %v412, 118
        %v455 = vpop.permute.xlu0 %454
        %458 = vrot.lane.b32.xlu0 %v420, 112
        %v459 = vpop.permute.xlu0 %458
        %462 = vrot.lane.b32.xlu0 %v428, 111
        %v463 = vpop.permute.xlu0 %462
        %466 = vrot.lane.b32.xlu0 %v436, 110
        %v467 = vpop.permute.xlu0 %466
        %v469 = vpack.c.bf16 %v439, %v380
        %v470 = vpack.c.bf16 %v447, %v443
        %v471 = vpack.c.bf16 %v455, %v451
        %v472 = vpack.c.bf16 %v463, %v459
        %v473 = vpack.c.bf16 %v467, %v467
        %v474 = vld [vmem:[%s4] sm:$0xf]
        %v475 = vld [vmem:[%s5] sm:$0xff]
        %477 = vset.pattern.permute.xlu0 0
        %478 = vperm.xlu0 %477, %v475
        %v479 = vpop.permute.xlu0 %478
        %vm481 = vcmask 588800
        %v483 = vsel %vm481, %v474, 0
        %v486 = vsel %vm350, %v473, 0
        %488 = vmatpush.bf16.msra.mxu0 0
        %489 = vmatpush.bf16.msra.mxu0 0
        %490 = vmatpush.bf16.msra.mxu0 0
        %491 = vmatpush.bf16.msra.mxu0 %v486
        %492 = vmatpush.bf16.msra.mxu0 %v472
        %493 = vmatpush.bf16.msra.mxu0 %v471
        %494 = vmatpush.bf16.msra.mxu0 %v470
        %495 = vmatpush.bf16.msra.mxu0 %v469
        %496 = vmatmul.bf16.gmra.mxu0 %v483
        %v497 = vpop.f32.mrf.mxu0
        %v498 = vadd.f32 %v479, %v497
        %v499 = vpop.f32.mrf.mxu0
        %500 = vdwg.mxu0
        %v501 = vld [vmem:[%s6] sm:$0xf]
        %v502 = vld [vmem:[%s6 + $0x4] sm:$0xf]
        %v503 = vpack.c.bf16 %v498, %v498
        %v504 = vld [vmem:[%s7] sm:$0xff]
        %v505 = vld [vmem:[%s7 + $0x8] sm:$0xff]
        %507 = vset.pattern.permute.xlu0 0
        %508 = vperm.xlu0 %507, %v504
        %v509 = vpop.permute.xlu0 %508
        %512 = vset.pattern.permute.xlu0 0
        %513 = vperm.xlu0 %512, %v505
        %v514 = vpop.permute.xlu0 %513
        %v518 = vunpack.c.l.b16 %v501
        %v519 = vunpack.c.l.b16 %v502
        %v520 = vpack.c.b16 %v519, %v518
        %v522 = vsel %vm346, %v520, 0
        %v525 = vsel %vm350, %v503, 0
        %527 = vmatpush.bf16.msra.mxu0 0
        %528 = vmatpush.bf16.msra.mxu0 0
        %529 = vmatpush.bf16.msra.mxu0 0
        %530 = vmatpush.bf16.msra.mxu0 0
        %531 = vmatpush.bf16.msra.mxu0 0
        %532 = vmatpush.bf16.msra.mxu0 0
        %533 = vmatpush.bf16.msra.mxu0 0
        %534 = vmatpush.bf16.msra.mxu0 %v525
        %535 = vmatmul.bf16.gmra.mxu0 %v522
        %v536 = vpop.f32.mrf.mxu0
        %v537 = vadd.f32 %v509, %v536
        %v538 = vpop.f32.mrf.mxu0
        %v539 = vadd.f32 %v514, %v538
        %540 = vdwg.mxu0
        %v541 = vmax.f32 %v537, 0.0
        %v542 = vmax.f32 %v539, 0.0
        %vm543 = vcmask 523264
        %544 = vst.msk [vmem:[%s325] sm:$0xff] %vm543, %v541
        %545 = vst.msk [vmem:[%s325 + $0x8] sm:$0xff] %vm543, %v542
        %s546 = sand.u32 %s206, 1
        %s547 = scalar_lea.sflag [#allocation4], %s546
        %s548 = sand.u32 %s206, 1
        %s549 = smul.addr %s548, 16
        %s550 = scalar_lea.vmem [#allocation5], %s549
        // Predicated region
        $region57: #{tpu_custom_call.1} parent=51 // pred_check
          %p551 = pneg %p216
        $region58: #{tpu_custom_call.1} parent=51 // pred_check_branch
          %553 = sbr.rel (%p551) target = $region60
        $region59: #{tpu_custom_call.1} parent=51 // pred_region
          %555 = vsyncadd %s547, 0
          %s556 = smul.addr %s25, 2
          %s557 = smul.addr %s556, 8
          %s558 = scalar_lea.hbm %s8, %s557
          %s559 = sshll.u32 %s550, 4
          %s560 = int_to_ptr.vmem [resolvable:$true] %s559
          %s561 = sshll.u32 %s558, 4
          %s562 = int_to_ptr.hbm [resolvable:$true] %s561
          %567 = dma.vmem_to_hbm [thread:$0]  %s560, 256, %s562, %s547, 128, 128, 8
        $region60: #{tpu_custom_call.1} parent=51 // pred_fallthru
          _
      $region52: #{tpu_custom_call.1} parent=5 // pred_fallthru
        _
      %p568 = scmp.le.s32.totalorder 2, %s20
      // Predicated region
      $region61: #{tpu_custom_call.1} parent=5 // pred_check
        %p569 = pneg %p568
      $region62: #{tpu_custom_call.1} parent=5 // pred_check_branch
        %571 = sbr.rel (%p569) target = $region64
      $region63: #{tpu_custom_call.1} parent=5 // pred_region
        %s572 = ssub.s32 %s20, 2
        // Predicated region
        $region65: #{tpu_custom_call.1} parent=63 // pred_check
          %p573 = pneg %p222
        $region66: #{tpu_custom_call.1} parent=63 // pred_check_branch
          %575 = sbr.rel (%p573) target = $region68
        $region67: #{tpu_custom_call.1} parent=63 // pred_region
          %s576 = sand.u32 %s207, 1
          %s577 = scalar_lea.sflag [#allocation4], %s576
          %s578 = sand.u32 %s207, 1
          %s579 = smul.addr %s578, 16
          %s580 = scalar_lea.vmem [#allocation5], %s579
          %582 = dma.done %s577, 256
        $region68: #{tpu_custom_call.1} parent=63 // pred_fallthru
          _
      $region64: #{tpu_custom_call.1} parent=5 // pred_fallthru
        _
    $region6: #{tpu_custom_call.1} parent=1 // loop_footer
      %s24 = sadd.s32 1, %s20
    $region7: #{tpu_custom_call.1} parent=1 // loop_footer_branch
      %19 = sbr.rel target = $region3
    $region8: #{tpu_custom_call.1} parent=1 // loop_exit
      _
    %583 = vsyncpa [#allocation3], 1
    %s584 = scalar_lea.sflag [#allocation3], 1
    %585 = vsyncpa %s584, 1
    %586 = vsyncpa [#allocation4], 1
    %s587 = scalar_lea.sflag [#allocation4], 1
    %588 = vsyncpa %s587, 1

</llo_original>
